<compile_context>
chip_gen: v7x
topology: tpu7x:2x2x1
jax: 0.10.0
libtpu: 0.0.40
codegen_flags: <defaults>
</compile_context>

<pallas_src>
import functools

import jax
import jax.numpy as jnp
from jax import lax
from jax.experimental import pallas as pl
from jax.experimental.pallas import tpu as pltpu

NEG_SLOPE = 0.01  # PyTorch nn.LeakyReLU default


def _attention_kernel(x_ref, w1t_ref, w2_ref, col_ref, wsp_ref, bias_ref, o_ref,
                      *, H, W):
    # x_ref   : (1, C, H*W) VMEM (lane-dense)
    # w1t_ref : (C, Cr)     VMEM   (W1 transposed; W1 is (Cr, C))
    # w2_ref  : (C, Cr)     VMEM
    # col_ref : (1, H*W)    VMEM int32 column index per flattened position
    # wsp_ref : (9,)        SMEM   flattened 3x3 spatial conv weight
    # bias_ref: (1,)        SMEM   spatial conv bias
    # o_ref   : (1, C, H*W) VMEM
    _, C, HW = x_ref.shape
    x = x_ref[0]                                                  # (C, HW)

    # ---------------- Channel attention ----------------
    # Global average pool: one lane-axis reduce * precomputed 1/(H*W).
    pooled = jnp.sum(x, axis=1, keepdims=True) * (1.0 / HW)       # (C, 1)
    # hidden[r] = sum_c W1[r, c] * pooled[c]
    h = jnp.sum(w1t_ref[...] * pooled, axis=0, keepdims=True)     # (1, Cr)
    h = jnp.where(h > 0, h, NEG_SLOPE * h)                        # LeakyReLU
    # ca[c] = sigmoid( sum_r W2[c, r] * hidden[r] )
    ca = jax.nn.sigmoid(jnp.sum(w2_ref[...] * h, axis=1, keepdims=True))  # (C, 1)
    out1 = x * ca                                                 # (C, HW)

    # ---------------- Spatial attention ----------------
    # Channel mean: cross-sublane sum * 1/C.
    sp = jnp.sum(out1, axis=0, keepdims=True) * (1.0 / C)         # (1, HW)

    idx = lax.broadcasted_iota(jnp.int32, (1, HW), 1)             # flat index
    col = col_ref[...]                                            # column index

    # 3x3 conv, dilation=2, padding=2: 9 taps at offsets (2*da, 2*db),
    # da,db in {-1,0,1}.  On the flattened axis each tap is a lane rotation by
    # -(2*da*W + 2*db); zero-padding (and roll wrap) is handled by the masks.
    acc = jnp.full((1, HW), bias_ref[0], dtype=jnp.float32)
    for a in range(3):
        da = 2 * (a - 1)
        if da < 0:
            row_ok = idx >= (-da) * W           # row >= 2
        elif da > 0:
            row_ok = idx < (H - da) * W         # row <= H-3
        else:
            row_ok = None
        for b in range(3):
            db = 2 * (b - 1)
            if db < 0:
                col_ok = col >= (-db)           # col >= 2
            elif db > 0:
                col_ok = col < (W - db)         # col <= W-3
            else:
                col_ok = None

            s = da * W + db
            tap = sp if s == 0 else pltpu.roll(sp, (-s) % HW, 1)

            if row_ok is not None and col_ok is not None:
                mask = jnp.logical_and(row_ok, col_ok)
            elif row_ok is not None:
                mask = row_ok
            else:
                mask = col_ok
            if mask is not None:
                tap = jnp.where(mask, tap, 0.0)

            acc = acc + wsp_ref[a * 3 + b] * tap

    sa = jax.nn.sigmoid(acc)                                      # (1, HW)
    o_ref[0] = (out1 * sa).astype(o_ref.dtype)


def attention_forward(x, w1, w2, w_sp, b_sp):
    """x: (B, C, H, W) f32; w1: (C//16, C); w2: (C, C//16); w_sp: (3,3); b_sp: (1,)."""
    B, C, H, W = x.shape
    HW = H * W
    Cr = w1.shape[0]

    x_flat = x.reshape(B, C, HW)                 # free view of contiguous NCHW
    w1t = jnp.transpose(w1)                      # (C, Cr)
    wsp_flat = w_sp.reshape(9)
    col_ids = jnp.tile(jnp.arange(W, dtype=jnp.int32), H).reshape(1, HW)

    kernel = functools.partial(_attention_kernel, H=H, W=W)

    out_flat = pl.pallas_call(
        kernel,
        out_shape=jax.ShapeDtypeStruct((B, C, HW), x.dtype),
        grid_spec=pltpu.PrefetchScalarGridSpec(
            num_scalar_prefetch=0,
            grid=(B,),
            in_specs=[
                pl.BlockSpec((1, C, HW), lambda b: (b, 0, 0)),
                pl.BlockSpec((C, Cr), lambda b: (0, 0)),
                pl.BlockSpec((C, Cr), lambda b: (0, 0)),
                pl.BlockSpec((1, HW), lambda b: (0, 0)),
                pl.BlockSpec(memory_space=pltpu.MemorySpace.SMEM),
                pl.BlockSpec(memory_space=pltpu.MemorySpace.SMEM),
            ],
            out_specs=pl.BlockSpec((1, C, HW), lambda b: (b, 0, 0)),
        ),
        compiler_params=pltpu.CompilerParams(dimension_semantics=("parallel",)),
    )(x_flat, w1t, w2, col_ids, wsp_flat, b_sp)

    # TODO(synk): for real RDASNet feature-map sizes on v7x (64 MiB VMEM), add a
    # spatially H-tiled variant with a 2-row halo instead of whole-volume blocks.
    return out_flat.reshape(B, C, H, W)


def attention_ref(x, w1, w2, w_sp, b_sp):
    """Pure-JAX reference matching the PyTorch forward semantics."""
    B, C, H, W = x.shape
    pooled = jnp.mean(x, axis=(2, 3))                       # (B, C)
    h = pooled @ w1.T                                       # (B, Cr)
    h = jnp.where(h > 0, h, NEG_SLOPE * h)
    ca = jax.nn.sigmoid(h @ w2.T)                           # (B, C)
    out1 = x * ca[:, :, None, None]
    sp = jnp.mean(out1, axis=1)                             # (B, H, W)
    spp = jnp.pad(sp, ((0, 0), (2, 2), (2, 2)))
    acc = jnp.full((B, H, W), b_sp[0])
    for a in range(3):
        for b in range(3):
            acc = acc + w_sp[a, b] * spp[:, 2 * a:2 * a + H, 2 * b:2 * b + W]
    sa = jax.nn.sigmoid(acc)
    return sa[:, None] * out1


if __name__ == "__main__":
    B, C, H, W = 2, 32, 16, 16       # channel=32, ratio=16 -> hidden=2
    Cr = C // 16

    key = jax.random.PRNGKey(0)
    kx, k1, k2, k3, k4 = jax.random.split(key, 5)
    x = jax.random.normal(kx, (B, C, H, W), dtype=jnp.float32)
    w1 = 0.1 * jax.random.normal(k1, (Cr, C), dtype=jnp.float32)   # conv1 1x1, no bias
    w2 = 0.1 * jax.random.normal(k2, (C, Cr), dtype=jnp.float32)   # conv2 1x1, no bias
    w_sp = 0.1 * jax.random.normal(k3, (3, 3), dtype=jnp.float32)  # spatial 3x3 conv weight
    b_sp = 0.1 * jax.random.normal(k4, (1,), dtype=jnp.float32)    # spatial conv bias

    out = attention_forward(x, w1, w2, w_sp, b_sp)
    out = jax.block_until_ready(out)

    ref = attention_ref(x, w1, w2, w_sp, b_sp)
    assert out.shape == (B, C, H, W)
    assert jnp.allclose(out, ref, atol=1e-5, rtol=1e-5), "mismatch vs reference"
    print("KERNEL_OK")
</pallas_src>

<mosaic_0001>
module attributes {stable_mosaic.version = 11 : i64} {
  func.func @_attention_kernel(%arg0: i32, %arg1: memref<1x32x256xf32, #tpu.memory_space<vmem>>, %arg2: memref<32x2xf32, #tpu.memory_space<vmem>>, %arg3: memref<32x2xf32, #tpu.memory_space<vmem>>, %arg4: memref<1x256xi32, #tpu.memory_space<vmem>>, %arg5: memref<9xf32, #tpu.memory_space<smem>>, %arg6: memref<1xf32, #tpu.memory_space<smem>>, %arg7: memref<1x32x256xf32, #tpu.memory_space<vmem>>) attributes {dimension_semantics = [#tpu.dimension_semantics<parallel>], iteration_bounds = array<i64: 2>, scalar_prefetch = 0 : i64, scratch_operands = 0 : i64, tpu.core_type = #tpu.core_type<tc>, window_params = [{transform_indices = @transform_0, window_bounds = array<i64: 1, 32, 256>}, {pipeline_mode = #tpu.pipeline_mode<synchronous>, transform_indices = @transform_1, window_bounds = array<i64: 32, 2>}, {pipeline_mode = #tpu.pipeline_mode<synchronous>, transform_indices = @transform_2, window_bounds = array<i64: 32, 2>}, {pipeline_mode = #tpu.pipeline_mode<synchronous>, transform_indices = @transform_3, window_bounds = array<i64: 1, 256>}, {transform_indices = @transform_4, window_bounds = array<i64: 9>}, {transform_indices = @transform_5, window_bounds = array<i64: 1>}, {transform_indices = @transform_6, window_bounds = array<i64: 1, 32, 256>}]} {
    %c0 = arith.constant 0 : index
    %c0_0 = arith.constant 0 : index
    %c0_1 = arith.constant 0 : index
    %0 = vector.load %arg1[%c0, %c0_0, %c0_1] : memref<1x32x256xf32, #tpu.memory_space<vmem>>, vector<1x32x256xf32>
    %1 = vector.shape_cast %0 : vector<1x32x256xf32> to vector<32x256xf32>
    %cst = arith.constant dense<0.000000e+00> : vector<32xf32>
    %2 = vector.multi_reduction <add>, %1, %cst [1] : vector<32x256xf32> to vector<32xf32>
    %3 = vector.shape_cast %2 : vector<32xf32> to vector<32x1xf32>
    %cst_2 = arith.constant 3.906250e-03 : f32
    %4 = vector.broadcast %cst_2 : f32 to vector<32x1xf32>
    %5 = arith.mulf %3, %4 : vector<32x1xf32>
    %c0_3 = arith.constant 0 : index
    %c0_4 = arith.constant 0 : index
    %6 = vector.load %arg2[%c0_3, %c0_4] : memref<32x2xf32, #tpu.memory_space<vmem>>, vector<32x2xf32>
    %7 = vector.broadcast %5 : vector<32x1xf32> to vector<32x2xf32>
    %8 = arith.mulf %6, %7 : vector<32x2xf32>
    %cst_5 = arith.constant dense<0.000000e+00> : vector<2xf32>
    %9 = vector.multi_reduction <add>, %8, %cst_5 [0] : vector<32x2xf32> to vector<2xf32>
    %10 = vector.shape_cast %9 : vector<2xf32> to vector<1x2xf32>
    %cst_6 = arith.constant 0.000000e+00 : f32
    %11 = vector.broadcast %cst_6 : f32 to vector<1x2xf32>
    %12 = arith.cmpf ogt, %10, %11 : vector<1x2xf32>
    %cst_7 = arith.constant 0.00999999977 : f32
    %13 = vector.broadcast %cst_7 : f32 to vector<1x2xf32>
    %14 = arith.mulf %13, %10 : vector<1x2xf32>
    %15 = arith.select %12, %10, %14 : vector<1x2xi1>, vector<1x2xf32>
    %c0_8 = arith.constant 0 : index
    %c0_9 = arith.constant 0 : index
    %16 = vector.load %arg3[%c0_8, %c0_9] : memref<32x2xf32, #tpu.memory_space<vmem>>, vector<32x2xf32>
    %17 = vector.broadcast %15 : vector<1x2xf32> to vector<32x2xf32>
    %18 = arith.mulf %16, %17 : vector<32x2xf32>
    %cst_10 = arith.constant dense<0.000000e+00> : vector<32xf32>
    %19 = vector.multi_reduction <add>, %18, %cst_10 [1] : vector<32x2xf32> to vector<32xf32>
    %20 = vector.shape_cast %19 : vector<32xf32> to vector<32x1xf32>
    %21 = arith.negf %20 : vector<32x1xf32>
    %22 = math.exp %21 : vector<32x1xf32>
    %cst_11 = arith.constant 1.000000e+00 : f32
    %23 = vector.broadcast %cst_11 : f32 to vector<32x1xf32>
    %24 = arith.addf %23, %22 : vector<32x1xf32>
    %25 = arith.divf %23, %24 : vector<32x1xf32>
    %26 = vector.broadcast %25 : vector<32x1xf32> to vector<32x256xf32>
    %27 = arith.mulf %1, %26 : vector<32x256xf32>
    %cst_12 = arith.constant dense<0.000000e+00> : vector<256xf32>
    %28 = vector.multi_reduction <add>, %27, %cst_12 [0] : vector<32x256xf32> to vector<256xf32>
    %29 = vector.shape_cast %28 : vector<256xf32> to vector<1x256xf32>
    %cst_13 = arith.constant 3.125000e-02 : f32
    %30 = vector.broadcast %cst_13 : f32 to vector<1x256xf32>
    %31 = arith.mulf %29, %30 : vector<1x256xf32>
    %32 = tpu.iota {dimensions = array<i32: 1>} : vector<1x256xi32>
    %c0_14 = arith.constant 0 : index
    %c0_15 = arith.constant 0 : index
    %33 = vector.load %arg4[%c0_14, %c0_15] : memref<1x256xi32, #tpu.memory_space<vmem>>, vector<1x256xi32>
    %c0_16 = arith.constant 0 : index
    %34 = memref.load %arg6[%c0_16] : memref<1xf32, #tpu.memory_space<smem>>
    %35 = vector.broadcast %34 : f32 to vector<1x256xf32>
    %c32_i32 = arith.constant 32 : i32
    %36 = vector.broadcast %c32_i32 : i32 to vector<1x256xi32>
    %37 = arith.cmpi sge, %32, %36 : vector<1x256xi32>
    %c2_i32 = arith.constant 2 : i32
    %38 = vector.broadcast %c2_i32 : i32 to vector<1x256xi32>
    %39 = arith.cmpi sge, %33, %38 : vector<1x256xi32>
    %c34_i32 = arith.constant 34 : i32
    %40 = tpu.dynamic_rotate %31 by %c34_i32 dim 1 : vector<1x256xf32>, i32 -> vector<1x256xf32>
    %41 = arith.andi %37, %39 : vector<1x256xi1>
    %cst_17 = arith.constant 0.000000e+00 : f32
    %42 = vector.broadcast %cst_17 : f32 to vector<1x256xf32>
    %43 = arith.select %41, %40, %42 : vector<1x256xi1>, vector<1x256xf32>
    %c0_18 = arith.constant 0 : index
    %44 = memref.load %arg5[%c0_18] : memref<9xf32, #tpu.memory_space<smem>>
    %45 = vector.broadcast %44 : f32 to vector<1x256xf32>
    %46 = arith.mulf %45, %43 : vector<1x256xf32>
    %47 = arith.addf %35, %46 : vector<1x256xf32>
    %c32_i32_19 = arith.constant 32 : i32
    %48 = tpu.dynamic_rotate %31 by %c32_i32_19 dim 1 : vector<1x256xf32>, i32 -> vector<1x256xf32>
    %cst_20 = arith.constant 0.000000e+00 : f32
    %49 = vector.broadcast %cst_20 : f32 to vector<1x256xf32>
    %50 = arith.select %37, %48, %49 : vector<1x256xi1>, vector<1x256xf32>
    %c1 = arith.constant 1 : index
    %51 = memref.load %arg5[%c1] : memref<9xf32, #tpu.memory_space<smem>>
    %52 = vector.broadcast %51 : f32 to vector<1x256xf32>
    %53 = arith.mulf %52, %50 : vector<1x256xf32>
    %54 = arith.addf %47, %53 : vector<1x256xf32>
    %c14_i32 = arith.constant 14 : i32
    %55 = vector.broadcast %c14_i32 : i32 to vector<1x256xi32>
    %56 = arith.cmpi slt, %33, %55 : vector<1x256xi32>
    %c30_i32 = arith.constant 30 : i32
    %57 = tpu.dynamic_rotate %31 by %c30_i32 dim 1 : vector<1x256xf32>, i32 -> vector<1x256xf32>
    %58 = arith.andi %37, %56 : vector<1x256xi1>
    %cst_21 = arith.constant 0.000000e+00 : f32
    %59 = vector.broadcast %cst_21 : f32 to vector<1x256xf32>
    %60 = arith.select %58, %57, %59 : vector<1x256xi1>, vector<1x256xf32>
    %c2 = arith.constant 2 : index
    %61 = memref.load %arg5[%c2] : memref<9xf32, #tpu.memory_space<smem>>
    %62 = vector.broadcast %61 : f32 to vector<1x256xf32>
    %63 = arith.mulf %62, %60 : vector<1x256xf32>
    %64 = arith.addf %54, %63 : vector<1x256xf32>
    %c2_i32_22 = arith.constant 2 : i32
    %65 = vector.broadcast %c2_i32_22 : i32 to vector<1x256xi32>
    %66 = arith.cmpi sge, %33, %65 : vector<1x256xi32>
    %c2_i32_23 = arith.constant 2 : i32
    %67 = tpu.dynamic_rotate %31 by %c2_i32_23 dim 1 : vector<1x256xf32>, i32 -> vector<1x256xf32>
    %cst_24 = arith.constant 0.000000e+00 : f32
    %68 = vector.broadcast %cst_24 : f32 to vector<1x256xf32>
    %69 = arith.select %66, %67, %68 : vector<1x256xi1>, vector<1x256xf32>
    %c3 = arith.constant 3 : index
    %70 = memref.load %arg5[%c3] : memref<9xf32, #tpu.memory_space<smem>>
    %71 = vector.broadcast %70 : f32 to vector<1x256xf32>
    %72 = arith.mulf %71, %69 : vector<1x256xf32>
    %73 = arith.addf %64, %72 : vector<1x256xf32>
    %c4 = arith.constant 4 : index
    %74 = memref.load %arg5[%c4] : memref<9xf32, #tpu.memory_space<smem>>
    %75 = vector.broadcast %74 : f32 to vector<1x256xf32>
    %76 = arith.mulf %75, %31 : vector<1x256xf32>
    %77 = arith.addf %73, %76 : vector<1x256xf32>
    %c14_i32_25 = arith.constant 14 : i32
    %78 = vector.broadcast %c14_i32_25 : i32 to vector<1x256xi32>
    %79 = arith.cmpi slt, %33, %78 : vector<1x256xi32>
    %c254_i32 = arith.constant 254 : i32
    %80 = tpu.dynamic_rotate %31 by %c254_i32 dim 1 : vector<1x256xf32>, i32 -> vector<1x256xf32>
    %cst_26 = arith.constant 0.000000e+00 : f32
    %81 = vector.broadcast %cst_26 : f32 to vector<1x256xf32>
    %82 = arith.select %79, %80, %81 : vector<1x256xi1>, vector<1x256xf32>
    %c5 = arith.constant 5 : index
    %83 = memref.load %arg5[%c5] : memref<9xf32, #tpu.memory_space<smem>>
    %84 = vector.broadcast %83 : f32 to vector<1x256xf32>
    %85 = arith.mulf %84, %82 : vector<1x256xf32>
    %86 = arith.addf %77, %85 : vector<1x256xf32>
    %c224_i32 = arith.constant 224 : i32
    %87 = vector.broadcast %c224_i32 : i32 to vector<1x256xi32>
    %88 = arith.cmpi slt, %32, %87 : vector<1x256xi32>
    %c2_i32_27 = arith.constant 2 : i32
    %89 = vector.broadcast %c2_i32_27 : i32 to vector<1x256xi32>
    %90 = arith.cmpi sge, %33, %89 : vector<1x256xi32>
    %c226_i32 = arith.constant 226 : i32
    %91 = tpu.dynamic_rotate %31 by %c226_i32 dim 1 : vector<1x256xf32>, i32 -> vector<1x256xf32>
    %92 = arith.andi %88, %90 : vector<1x256xi1>
    %cst_28 = arith.constant 0.000000e+00 : f32
    %93 = vector.broadcast %cst_28 : f32 to vector<1x256xf32>
    %94 = arith.select %92, %91, %93 : vector<1x256xi1>, vector<1x256xf32>
    %c6 = arith.constant 6 : index
    %95 = memref.load %arg5[%c6] : memref<9xf32, #tpu.memory_space<smem>>
    %96 = vector.broadcast %95 : f32 to vector<1x256xf32>
    %97 = arith.mulf %96, %94 : vector<1x256xf32>
    %98 = arith.addf %86, %97 : vector<1x256xf32>
    %c224_i32_29 = arith.constant 224 : i32
    %99 = tpu.dynamic_rotate %31 by %c224_i32_29 dim 1 : vector<1x256xf32>, i32 -> vector<1x256xf32>
    %cst_30 = arith.constant 0.000000e+00 : f32
    %100 = vector.broadcast %cst_30 : f32 to vector<1x256xf32>
    %101 = arith.select %88, %99, %100 : vector<1x256xi1>, vector<1x256xf32>
    %c7 = arith.constant 7 : index
    %102 = memref.load %arg5[%c7] : memref<9xf32, #tpu.memory_space<smem>>
    %103 = vector.broadcast %102 : f32 to vector<1x256xf32>
    %104 = arith.mulf %103, %101 : vector<1x256xf32>
    %105 = arith.addf %98, %104 : vector<1x256xf32>
    %c14_i32_31 = arith.constant 14 : i32
    %106 = vector.broadcast %c14_i32_31 : i32 to vector<1x256xi32>
    %107 = arith.cmpi slt, %33, %106 : vector<1x256xi32>
    %c222_i32 = arith.constant 222 : i32
    %108 = tpu.dynamic_rotate %31 by %c222_i32 dim 1 : vector<1x256xf32>, i32 -> vector<1x256xf32>
    %109 = arith.andi %88, %107 : vector<1x256xi1>
    %cst_32 = arith.constant 0.000000e+00 : f32
    %110 = vector.broadcast %cst_32 : f32 to vector<1x256xf32>
    %111 = arith.select %109, %108, %110 : vector<1x256xi1>, vector<1x256xf32>
    %c8 = arith.constant 8 : index
    %112 = memref.load %arg5[%c8] : memref<9xf32, #tpu.memory_space<smem>>
    %113 = vector.broadcast %112 : f32 to vector<1x256xf32>
    %114 = arith.mulf %113, %111 : vector<1x256xf32>
    %115 = arith.addf %105, %114 : vector<1x256xf32>
    %116 = arith.negf %115 : vector<1x256xf32>
    %117 = math.exp %116 : vector<1x256xf32>
    %cst_33 = arith.constant 1.000000e+00 : f32
    %118 = vector.broadcast %cst_33 : f32 to vector<1x256xf32>
    %119 = arith.addf %118, %117 : vector<1x256xf32>
    %120 = arith.divf %118, %119 : vector<1x256xf32>
    %121 = vector.broadcast %120 : vector<1x256xf32> to vector<32x256xf32>
    %122 = arith.mulf %27, %121 : vector<32x256xf32>
    %c0_34 = arith.constant 0 : index
    %c0_35 = arith.constant 0 : index
    %c0_36 = arith.constant 0 : index
    %123 = vector.load %arg7[%c0_34, %c0_35, %c0_36] : memref<1x32x256xf32, #tpu.memory_space<vmem>>, vector<1x32x256xf32>
    %124 = vector.shape_cast %123 : vector<1x32x256xf32> to vector<32x256xf32>
    %125 = vector.shape_cast %122 : vector<32x256xf32> to vector<1x32x256xf32>
    tpu.vector_store %arg7[%c0_34, %c0_35, %c0_36], %125 {strides = array<i32>} : memref<1x32x256xf32, #tpu.memory_space<vmem>>, vector<1x32x256xf32>,
    return
  }
  func.func @transform_0(%arg0: i32) -> (i32, i32, i32) {
    %c0_i32 = arith.constant 0 : i32
    %c0_i32_0 = arith.constant 0 : i32
    %c0_i32_1 = arith.constant 0 : i32
    return %arg0, %c0_i32, %c0_i32_0 : i32, i32, i32
  }
  func.func @transform_1(%arg0: i32) -> (i32, i32) {
    %c0_i32 = arith.constant 0 : i32
    %c0_i32_0 = arith.constant 0 : i32
    %c0_i32_1 = arith.constant 0 : i32
    return %c0_i32, %c0_i32_0 : i32, i32
  }
  func.func @transform_2(%arg0: i32) -> (i32, i32) {
    %c0_i32 = arith.constant 0 : i32
    %c0_i32_0 = arith.constant 0 : i32
    %c0_i32_1 = arith.constant 0 : i32
    return %c0_i32, %c0_i32_0 : i32, i32
  }
  func.func @transform_3(%arg0: i32) -> (i32, i32) {
    %c0_i32 = arith.constant 0 : i32
    %c0_i32_0 = arith.constant 0 : i32
    %c0_i32_1 = arith.constant 0 : i32
    return %c0_i32, %c0_i32_0 : i32, i32
  }
  func.func @transform_4(%arg0: i32) -> i32 {
    %c0_i32 = arith.constant 0 : i32
    %c0_i32_0 = arith.constant 0 : i32
    return %c0_i32 : i32
  }
  func.func @transform_5(%arg0: i32) -> i32 {
    %c0_i32 = arith.constant 0 : i32
    %c0_i32_0 = arith.constant 0 : i32
    return %c0_i32 : i32
  }
  func.func @transform_6(%arg0: i32) -> (i32, i32, i32) {
    %c0_i32 = arith.constant 0 : i32
    %c0_i32_0 = arith.constant 0 : i32
    %c0_i32_1 = arith.constant 0 : i32
    return %arg0, %c0_i32, %c0_i32_0 : i32, i32, i32
  }
}

</mosaic_0001>

<llo_original>
// kernel: tpu_custom_call.1
$region0: #{tpu_custom_call.1}
  #allocation0 [shape = 'u32[]', space=smem, size = 0x4, offset = 0x4, fixed_abs, tag = 'smem constant byte address 0x4 - core index']
  #allocation1 [shape = 'u32[144,128]{1,0:T(1,128)}', space=vmem, size = 0x12000, scoped, tag = 'internal scratch']
  #allocation2 [shape = 'f32[1]{0:T(128)S(6)}', space=smem, size = 0x200, scoped, tag = 'scoped memory for tpu_custom_call.1']
  %s0 = inlined_call_operand.hbm [shape: f32[2,32,256], index: 0, kind: input, shape index: {}]
  %s1 = inlined_call_operand.vmem [shape: f32[32,2], index: 1, kind: input, shape index: {}]
  %s2 = inlined_call_operand.vmem [shape: f32[32,2], index: 2, kind: input, shape index: {}]
  %s3 = inlined_call_operand.vmem [shape: s32[1,256], index: 3, kind: input, shape index: {}]
  %s4 = inlined_call_operand.vmem [shape: f32[9], index: 4, kind: input, shape index: {}]
  %s5 = inlined_call_operand.<no memory space> [shape: f32[1], index: 5, kind: input, shape index: {}]
  %s6 = inlined_call_operand.hbm [shape: f32[2,32,256], index: 6, kind: output, shape index: {}]
  %s7 = sld [smem:[#allocation0]]
  $region65: #{tpu_custom_call.1} parent=0
    _
  %s9 = ssub.s32 1, %s7
  %s10 = scalar_select 0, %s9, %s7
  %11 = sst [smem:[#allocation2]] %s5
  $region1: #{tpu_custom_call.1} parent=0
    #allocation3 [shape = 'u8[65536]{0}', space=vmem, size = 0x10000, scoped, tag = 'input window, operand 0']
    #allocation4 [shape = 's32[2]{0}', space=sflag, size = 0x8, scoped, tag = 'scoped memory for tpu_custom_call.1']
    #allocation5 [shape = 's32[2]{0}', space=sflag, size = 0x8, scoped, tag = 'scoped memory for tpu_custom_call.1']
    #allocation6 [shape = 's32[2]{0}', space=sflag, size = 0x8, scoped, tag = 'scoped memory for tpu_custom_call.1']
    #allocation7 [shape = 'u8[512]{0}', space=smem, size = 0x200, scoped, tag = 'input window, operand 4, single buffered']
    #allocation8 [shape = 'u8[65536]{0}', space=vmem, size = 0x10000, scoped, tag = 'output window, operand 0']
    %12 = vsyncpa [#allocation4], 0
    %s13 = scalar_lea.sflag [#allocation4], 1
    %14 = vsyncpa %s13, 0
    %15 = vsyncpa [#allocation6], 0
    %16 = vsyncpa [#allocation5], 0
    %s17 = scalar_lea.sflag [#allocation5], 1
    %18 = vsyncpa %s17, 0
    loop: start=0, step=1, limit=4
    $region2: #{tpu_custom_call.1} parent=1 // loop_pre_header
      _
    $region3: #{tpu_custom_call.1} parent=1 // loop_header
      %s20 = sphi 0, %s24
      %p21 = scmp.ge.s32.totalorder %s20, 4
      %s30 = sphi 0, %s32
      %s33 = sphi 0, %s30
      %s34 = sphi 0, %s33
      %s50 = sphi 0, %s34
      %s54 = sphi 0, %s54
      %s56 = sphi 0, %s54
      %s57 = sphi 0, %s56
      %s71 = sphi 0, %s57
      %s75 = sphi 0, %s75
      %s77 = sphi 0, %s75
      %s78 = sphi 0, %s77
      %s92 = sphi 0, %s78
      %s96 = sphi 0, %s96
      %s98 = sphi 0, %s96
      %s99 = sphi 0, %s98
      %s113 = sphi 0, %s99
      %s117 = sphi 0, %s117
      %s119 = sphi 0, %s117
      %s120 = sphi 0, %s119
      %s134 = sphi 0, %s120
      %s138 = sphi 0, %s138
      %s140 = sphi 0, %s138
      %s141 = sphi 0, %s140
      %s155 = sphi 0, %s141
      %s161 = sphi 0, %s163
      %s164 = sphi 0, %s161
      %s165 = sphi 0, %s164
      %s181 = sphi 0, %s165
    $region4: #{tpu_custom_call.1} parent=1 // loop_header_branch
      %23 = sbr.rel (%p21) target = $region8
    $region5: #{tpu_custom_call.1} parent=1 // loop_body
      %s25 = ssub.s32 %s20, 1
      %s26 = ssub.s32 %s20, 2
      %s27 = sadd.s32 %s20, 1
      %s28 = ssub.s32 %s20, %s27
      %p29 = scmp.eq.s32.totalorder %s28, 0
      %s31 = sadd.s32 %s30, 1
      %s32 = scalar_select %p29, %s30, %s31
      %p35 = pneg %p29
      %p36 = scmp.eq.s32.totalorder %s20, 1
      %p37 = por %p35, %p36
      %p38 = scmp.ne.s32.totalorder %s30, %s33
      %p39 = scmp.eq.s32.totalorder %s20, 0
      %p40 = por %p38, %p39
      %p41 = scmp.ne.s32.totalorder %s30, %s33
      %p42 = scmp.eq.s32.totalorder %s25, 1
      %p43 = por %p41, %p42
      %p44 = scmp.ne.s32.totalorder %s33, %s34
      %p45 = scmp.eq.s32.totalorder %s25, 0
      %p46 = por %p44, %p45
      %p47 = scmp.ne.s32.totalorder %s33, %s34
      %p48 = scmp.eq.s32.totalorder %s26, 1
      %p49 = por %p47, %p48
      %p51 = scmp.ne.s32.totalorder %s34, %s50
      %p52 = scmp.eq.s32.totalorder %s26, 0
      %p53 = por %p51, %p52
      %s55 = sadd.s32 %s54, 1
      %p58 = scmp.eq.s32.totalorder %s20, 1
      %p59 = scmp.ne.s32.totalorder %s54, %s56
      %p60 = scmp.eq.s32.totalorder %s20, 0
      %p61 = por %p59, %p60
      %p62 = scmp.ne.s32.totalorder %s54, %s56
      %p63 = scmp.eq.s32.totalorder %s25, 1
      %p64 = por %p62, %p63
      %p65 = scmp.ne.s32.totalorder %s56, %s57
      %p66 = scmp.eq.s32.totalorder %s25, 0
      %p67 = por %p65, %p66
      %p68 = scmp.ne.s32.totalorder %s56, %s57
      %p69 = scmp.eq.s32.totalorder %s26, 1
      %p70 = por %p68, %p69
      %p72 = scmp.ne.s32.totalorder %s57, %s71
      %p73 = scmp.eq.s32.totalorder %s26, 0
      %p74 = por %p72, %p73
      %s76 = sadd.s32 %s75, 1
      %p79 = scmp.eq.s32.totalorder %s20, 1
      %p80 = scmp.ne.s32.totalorder %s75, %s77
      %p81 = scmp.eq.s32.totalorder %s20, 0
      %p82 = por %p80, %p81
      %p83 = scmp.ne.s32.totalorder %s75, %s77
      %p84 = scmp.eq.s32.totalorder %s25, 1
      %p85 = por %p83, %p84
      %p86 = scmp.ne.s32.totalorder %s77, %s78
      %p87 = scmp.eq.s32.totalorder %s25, 0
      %p88 = por %p86, %p87
      %p89 = scmp.ne.s32.totalorder %s77, %s78
      %p90 = scmp.eq.s32.totalorder %s26, 1
      %p91 = por %p89, %p90
      %p93 = scmp.ne.s32.totalorder %s78, %s92
      %p94 = scmp.eq.s32.totalorder %s26, 0
      %p95 = por %p93, %p94
      %s97 = sadd.s32 %s96, 1
      %p100 = scmp.eq.s32.totalorder %s20, 1
      %p101 = scmp.ne.s32.totalorder %s96, %s98
      %p102 = scmp.eq.s32.totalorder %s20, 0
      %p103 = por %p101, %p102
      %p104 = scmp.ne.s32.totalorder %s96, %s98
      %p105 = scmp.eq.s32.totalorder %s25, 1
      %p106 = por %p104, %p105
      %p107 = scmp.ne.s32.totalorder %s98, %s99
      %p108 = scmp.eq.s32.totalorder %s25, 0
      %p109 = por %p107, %p108
      %p110 = scmp.ne.s32.totalorder %s98, %s99
      %p111 = scmp.eq.s32.totalorder %s26, 1
      %p112 = por %p110, %p111
      %p114 = scmp.ne.s32.totalorder %s99, %s113
      %p115 = scmp.eq.s32.totalorder %s26, 0
      %p116 = por %p114, %p115
      %s118 = sadd.s32 %s117, 1
      %p121 = scmp.eq.s32.totalorder %s20, 1
      %p122 = scmp.ne.s32.totalorder %s117, %s119
      %p123 = scmp.eq.s32.totalorder %s20, 0
      %p124 = por %p122, %p123
      %p125 = scmp.ne.s32.totalorder %s117, %s119
      %p126 = scmp.eq.s32.totalorder %s25, 1
      %p127 = por %p125, %p126
      %p128 = scmp.ne.s32.totalorder %s119, %s120
      %p129 = scmp.eq.s32.totalorder %s25, 0
      %p130 = por %p128, %p129
      %p131 = scmp.ne.s32.totalorder %s119, %s120
      %p132 = scmp.eq.s32.totalorder %s26, 1
      %p133 = por %p131, %p132
      %p135 = scmp.ne.s32.totalorder %s120, %s134
      %p136 = scmp.eq.s32.totalorder %s26, 0
      %p137 = por %p135, %p136
      %s139 = sadd.s32 %s138, 1
      %p142 = scmp.eq.s32.totalorder %s20, 1
      %p143 = scmp.ne.s32.totalorder %s138, %s140
      %p144 = scmp.eq.s32.totalorder %s20, 0
      %p145 = por %p143, %p144
      %p146 = scmp.ne.s32.totalorder %s138, %s140
      %p147 = scmp.eq.s32.totalorder %s25, 1
      %p148 = por %p146, %p147
      %p149 = scmp.ne.s32.totalorder %s140, %s141
      %p150 = scmp.eq.s32.totalorder %s25, 0
      %p151 = por %p149, %p150
      %p152 = scmp.ne.s32.totalorder %s140, %s141
      %p153 = scmp.eq.s32.totalorder %s26, 1
      %p154 = por %p152, %p153
      %p156 = scmp.ne.s32.totalorder %s141, %s155
      %p157 = scmp.eq.s32.totalorder %s26, 0
      %p158 = por %p156, %p157
      %s159 = ssub.s32 %s20, %s27
      %p160 = scmp.eq.s32.totalorder %s159, 0
      %s162 = sadd.s32 %s161, 1
      %s163 = scalar_select %p160, %s161, %s162
      %p166 = pneg %p160
      %p167 = scmp.eq.s32.totalorder %s20, 1
      %p168 = por %p166, %p167
      %p169 = scmp.ne.s32.totalorder %s161, %s164
      %p170 = scmp.eq.s32.totalorder %s20, 0
      %p171 = por %p169, %p170
      %p172 = scmp.ne.s32.totalorder %s161, %s164
      %p173 = scmp.eq.s32.totalorder %s25, 1
      %p174 = por %p172, %p173
      %p175 = scmp.ne.s32.totalorder %s164, %s165
      %p176 = scmp.eq.s32.totalorder %s25, 0
      %p177 = por %p175, %p176
      %p178 = scmp.ne.s32.totalorder %s164, %s165
      %p179 = scmp.eq.s32.totalorder %s26, 1
      %p180 = por %p178, %p179
      %p182 = scmp.ne.s32.totalorder %s165, %s181
      %p183 = scmp.eq.s32.totalorder %s26, 0
      %p184 = por %p182, %p183
      %p185 = scmp.le.s32.totalorder 1, %s20
      %p186 = scmp.lt.s32.totalorder %s20, 3
      %p187 = pnand %p185, %p186
      %p188 = pneg %p187
      // Predicated region
      $region9: #{tpu_custom_call.1} parent=5 // pred_check
        _
      $region10: #{tpu_custom_call.1} parent=5 // pred_check_branch
        %190 = sbr.rel (%p187) target = $region12
      $region11: #{tpu_custom_call.1} parent=5 // pred_region
        %s191 = ssub.s32 %s20, 1
        // Predicated region
        $region13: #{tpu_custom_call.1} parent=11 // pred_check
          %p192 = pneg %p67
        $region14: #{tpu_custom_call.1} parent=11 // pred_check_branch
          %194 = sbr.rel (%p192) target = $region16
        $region15: #{tpu_custom_call.1} parent=11 // pred_region
          _
        $region16: #{tpu_custom_call.1} parent=11 // pred_fallthru
          _
        // Predicated region
        $region17: #{tpu_custom_call.1} parent=11 // pred_check
          %p195 = pneg %p88
        $region18: #{tpu_custom_call.1} parent=11 // pred_check_branch
          %197 = sbr.rel (%p195) target = $region20
        $region19: #{tpu_custom_call.1} parent=11 // pred_region
          _
        $region20: #{tpu_custom_call.1} parent=11 // pred_fallthru
          _
        // Predicated region
        $region21: #{tpu_custom_call.1} parent=11 // pred_check
          %p198 = pneg %p109
        $region22: #{tpu_custom_call.1} parent=11 // pred_check_branch
          %200 = sbr.rel (%p198) target = $region24
        $region23: #{tpu_custom_call.1} parent=11 // pred_region
          _
        $region24: #{tpu_custom_call.1} parent=11 // pred_fallthru
          _
        // Predicated region
        $region25: #{tpu_custom_call.1} parent=11 // pred_check
          %p201 = pneg %p130
        $region26: #{tpu_custom_call.1} parent=11 // pred_check_branch
          %203 = sbr.rel (%p201) target = $region28
        $region27: #{tpu_custom_call.1} parent=11 // pred_region
          %s205 = ssub.s32 16, 16
          %206 = vsyncadd [#allocation6], %s205
          %s208 = sshll.u32 %s4, 4
          %s209 = int_to_ptr.vmem [resolvable:$true] %s208
          %211 = dma.vmem_to_smem %s209, 16, [#allocation7], [#allocation6]
        $region28: #{tpu_custom_call.1} parent=11 // pred_fallthru
          _
        // Predicated region
        $region29: #{tpu_custom_call.1} parent=11 // pred_check
          %p212 = pneg %p151
        $region30: #{tpu_custom_call.1} parent=11 // pred_check_branch
          %214 = sbr.rel (%p212) target = $region32
        $region31: #{tpu_custom_call.1} parent=11 // pred_region
          _
        $region32: #{tpu_custom_call.1} parent=11 // pred_fallthru
          _
      $region12: #{tpu_custom_call.1} parent=5 // pred_fallthru
        _
      %p215 = scmp.lt.s32.totalorder %s20, 2
      // Predicated region
      $region33: #{tpu_custom_call.1} parent=5 // pred_check
        %p216 = pneg %p215
      $region34: #{tpu_custom_call.1} parent=5 // pred_check_branch
        %218 = sbr.rel (%p216) target = $region36
      $region35: #{tpu_custom_call.1} parent=5 // pred_region
        // Predicated region
        $region37: #{tpu_custom_call.1} parent=35 // pred_check
          %p219 = pneg %p40
        $region38: #{tpu_custom_call.1} parent=35 // pred_check_branch
          %221 = sbr.rel (%p219) target = $region40
        $region39: #{tpu_custom_call.1} parent=35 // pred_region
          %s222 = sand.u32 %s30, 1
          %s223 = scalar_lea.sflag [#allocation4], %s222
          %s224 = sand.u32 %s30, 1
          %s225 = smul.addr %s224, 64
          %s226 = scalar_lea.vmem [#allocation3], %s225
          %s228 = ssub.s32 1024, 1024
          %229 = vsyncadd %s223, %s228
          %s230 = smul.addr %s20, 8
          %s231 = smul.addr %s230, 128
          %s232 = scalar_lea.hbm %s0, %s231
          %s233 = sshll.u32 %s226, 4
          %s234 = int_to_ptr.vmem [resolvable:$true] %s233
          %239 = dma.hbm_to_vmem [thread:$0]  %s232, 1024, %s234, %s223, 256, 256, 16
        $region40: #{tpu_custom_call.1} parent=35 // pred_fallthru
          _
      $region36: #{tpu_custom_call.1} parent=5 // pred_fallthru
        _
      %p240 = scmp.le.s32.totalorder 1, %s20
      %p241 = scmp.lt.s32.totalorder %s20, 3
      %p242 = pnand %p240, %p241
      %p243 = pneg %p242
      // Predicated region
      $region41: #{tpu_custom_call.1} parent=5 // pred_check
        _
      $region42: #{tpu_custom_call.1} parent=5 // pred_check_branch
        %245 = sbr.rel (%p242) target = $region44
      $region43: #{tpu_custom_call.1} parent=5 // pred_region
        %s246 = ssub.s32 %s20, 1
        %s247 = sand.u32 %s33, 1
        %s248 = scalar_lea.sflag [#allocation4], %s247
        %s249 = sand.u32 %s33, 1
        %s250 = smul.addr %s249, 64
        %s251 = scalar_lea.vmem [#allocation3], %s250
        // Predicated region
        $region45: #{tpu_custom_call.1} parent=43 // pred_check
          %p252 = pneg %p46
        $region46: #{tpu_custom_call.1} parent=43 // pred_check_branch
          %254 = sbr.rel (%p252) target = $region48
        $region47: #{tpu_custom_call.1} parent=43 // pred_region
          %255 = dma.done %s248, 1024
        $region48: #{tpu_custom_call.1} parent=43 // pred_fallthru
          _
        // Predicated region
        $region49: #{tpu_custom_call.1} parent=43 // pred_check
          %p256 = pneg %p130
        $region50: #{tpu_custom_call.1} parent=43 // pred_check_branch
          %258 = sbr.rel (%p256) target = $region52
        $region51: #{tpu_custom_call.1} parent=43 // pred_region
          %259 = dma.done [#allocation6], 16
        $region52: #{tpu_custom_call.1} parent=43 // pred_fallthru
          _
        %260 = sfence
        %s261 = sand.u32 %s33, 1
        %s262 = scalar_lea.sflag [#allocation4], %s261
        %s263 = sand.u32 %s33, 1
        %s264 = smul.addr %s263, 64
        %s265 = scalar_lea.vmem [#allocation3], %s264
        %p266 = pneg %p46
        %p267 = pneg %p43
        %p268 = pneg %p67
        %p269 = pneg %p64
        %p270 = pneg %p88
        %p271 = pneg %p85
        %p272 = pneg %p109
        %p273 = pneg %p106
        %p274 = pneg %p130
        %p275 = pneg %p127
        %p276 = pneg %p151
        %p277 = pneg %p148
        %p278 = pneg %p177
        %p279 = pneg %p174
        %s280 = sand.u32 %s164, 1
        %s281 = scalar_lea.sflag [#allocation5], %s280
        %s282 = sand.u32 %s164, 1
        %s283 = smul.addr %s282, 64
        %s284 = scalar_lea.vmem [#allocation8], %s283
        %v285 = vld [vmem:[%s251] sm:$0xff]
        %v286 = vld [vmem:[%s251 + $0x8] sm:$0xff]
        %v287 = vld [vmem:[%s251 + $0x10] sm:$0xff]
        %v288 = vld [vmem:[%s251 + $0x18] sm:$0xff]
        %v289 = vld [vmem:[%s251 + $0x20] sm:$0xff]
        %v290 = vld [vmem:[%s251 + $0x28] sm:$0xff]
        %v291 = vld [vmem:[%s251 + $0x30] sm:$0xff]
        %v292 = vld [vmem:[%s251 + $0x38] sm:$0xff]
        %v293 = vadd.f32 %v285, %v286
        %294 = vadd.xlane.f32.xlu0 %v293
        %v295 = vpop.xlane.xlu0 %294
        %v296 = vadd.f32 %v287, %v288
        %297 = vadd.xlane.f32.xlu0 %v296
        %v298 = vpop.xlane.xlu0 %297
        %v299 = vadd.f32 %v289, %v290
        %300 = vadd.xlane.f32.xlu0 %v299
        %v301 = vpop.xlane.xlu0 %300
        %v302 = vadd.f32 %v291, %v292
        %303 = vadd.xlane.f32.xlu0 %v302
        %v304 = vpop.xlane.xlu0 %303
        %v305 = vmul.f32 %v295, 0.00390625
        %v306 = vmul.f32 %v298, 0.00390625
        %v307 = vmul.f32 %v301, 0.00390625
        %v308 = vmul.f32 %v304, 0.00390625
        %v309 = vld [vmem:[%s1] sm:$0xff]
        %v310 = vld [vmem:[%s1 + $0x8] sm:$0xff]
        %v311 = vld [vmem:[%s1 + $0x10] sm:$0xff]
        %v312 = vld [vmem:[%s1 + $0x18] sm:$0xff]
        %v313 = vmul.f32 %v309, %v305
        %v314 = vmul.f32 %v310, %v306
        %v315 = vmul.f32 %v311, %v307
        %v316 = vmul.f32 %v312, %v308
        %vm317 = vcmask 15360
        %v318 = vsel %vm317, %v313, 0.0
        %v319 = vsel %vm317, %v314, 0.0
        %v320 = vadd.f32 %v318, %v319
        %v321 = vsel %vm317, %v315, 0.0
        %v322 = vadd.f32 %v320, %v321
        %v323 = vsel %vm317, %v316, 0.0
        %v324 = vadd.f32 %v322, %v323
        %v325 = vrot.slane %v324, 4
        %v326 = vadd.f32 %v324, %v325
        %v327 = vrot.slane %v326, 2
        %v328 = vadd.f32 %v326, %v327
        %v329 = vrot.slane %v328, 1
        %v330 = vadd.f32 %v328, %v329
        %vm331 = vcmp.gt.f32.partialorder %v330, 0.0
        %v332 = vmul.f32 %v330, 0.01
        %v333 = vsel %vm331, %v330, %v332
        %v334 = vld [vmem:[%s2] sm:$0xff]
        %v335 = vld [vmem:[%s2 + $0x8] sm:$0xff]
        %v336 = vld [vmem:[%s2 + $0x10] sm:$0xff]
        %v337 = vld [vmem:[%s2 + $0x18] sm:$0xff]
        %v338 = vmul.f32 %v334, %v333
        %v339 = vmul.f32 %v335, %v333
        %v340 = vmul.f32 %v336, %v333
        %v341 = vmul.f32 %v337, %v333
        %v342 = vsel %vm317, %v338, 0.0
        %343 = vadd.xlane.f32.xlu0 %v342
        %v344 = vpop.xlane.xlu0 %343
        %v345 = vsel %vm317, %v339, 0.0
        %346 = vadd.xlane.f32.xlu0 %v345
        %v347 = vpop.xlane.xlu0 %346
        %v348 = vsel %vm317, %v340, 0.0
        %349 = vadd.xlane.f32.xlu0 %v348
        %v350 = vpop.xlane.xlu0 %349
        %v351 = vsel %vm317, %v341, 0.0
        %352 = vadd.xlane.f32.xlu0 %v351
        %v353 = vpop.xlane.xlu0 %352
        %v354 = vxor.u32 %v344, 2147483648
        %v355 = vxor.u32 %v347, 2147483648
        %v356 = vxor.u32 %v350, 2147483648
        %v357 = vxor.u32 %v353, 2147483648
        %v358 = vmul.f32 %v354, 1.442695
        %v359 = vpow.pop %v358
        %v360 = vmul.f32 %v355, 1.442695
        %v361 = vpow.pop %v360
        %v362 = vmul.f32 %v356, 1.442695
        %v363 = vpow.pop %v362
        %v364 = vmul.f32 %v357, 1.442695
        %v365 = vpow.pop %v364
        %v366 = vadd.f32 %v359, 1.0
        %v367 = vadd.f32 %v361, 1.0
        %v368 = vadd.f32 %v363, 1.0
        %v369 = vadd.f32 %v365, 1.0
        %v370 = vrcp.pop %v366
        %v371 = vmul.f32 1.0, %v370
        %v372 = vrcp.pop %v367
        %v373 = vmul.f32 1.0, %v372
        %v374 = vrcp.pop %v368
        %v375 = vmul.f32 1.0, %v374
        %v376 = vrcp.pop %v369
        %v377 = vmul.f32 1.0, %v376
        %v378 = vmul.f32 %v285, %v371
        %v379 = vmul.f32 %v286, %v371
        %v380 = vmul.f32 %v287, %v373
        %v381 = vmul.f32 %v288, %v373
        %v382 = vmul.f32 %v289, %v375
        %v383 = vmul.f32 %v290, %v375
        %v384 = vmul.f32 %v291, %v377
        %v385 = vmul.f32 %v292, %v377
        %v386 = vadd.f32 %v378, %v380
        %v387 = vadd.f32 %v386, %v382
        %v388 = vadd.f32 %v387, %v384
        %v389 = vrot.slane %v388, 4
        %v390 = vadd.f32 %v388, %v389
        %v391 = vrot.slane %v390, 2
        %v392 = vadd.f32 %v390, %v391
        %v393 = vrot.slane %v392, 1
        %v394 = vadd.f32 %v392, %v393
        %v395 = vadd.f32 %v379, %v381
        %v396 = vadd.f32 %v395, %v383
        %v397 = vadd.f32 %v396, %v385
        %v398 = vrot.slane %v397, 4
        %v399 = vadd.f32 %v397, %v398
        %v400 = vrot.slane %v399, 2
        %v401 = vadd.f32 %v399, %v400
        %v402 = vrot.slane %v401, 1
        %v403 = vadd.f32 %v401, %v402
        %v404 = vmul.f32 %v394, 0.03125
        %v405 = vmul.f32 %v403, 0.03125
        %v406 = vlaneseq
        %v407 = vand.u32 %v406, 127
        %v408 = vadd.s32 %v407, 128
        %v409 = vld [vmem:[%s3] sm:$0x3]
        %s410 = sld [smem:[#allocation2]]
        %v411 = vstv %s410
        %vm412 = vcmp.ge.s32.totalorder %v407, 32
        %vm413 = vcmp.ge.s32.totalorder %v408, 32
        %vm414 = vcmp.ge.s32.totalorder %v409, 2
        %415 = vrot.lane.b32.xlu0 %v404, 34
        %v416 = vpop.permute.xlu0 %415
        %417 = vrot.lane.b32.xlu0 %v405, 34
        %v418 = vpop.permute.xlu0 %417
        %vm419 = vcmp.lt.s32.totalorder %v407, 34
        %v420 = vsel %vm419, %v416, %v418
        %v421 = vsel %vm419, %v418, %v416
        %v422 = vsel %vm414, 1, 0
        %v423 = vlaneseq
        %v424 = vshrl.u32 %v423, 7
        %v425 = vsub.s32 0, %v424
        %v426 = vrot.slane %v422, %v425
        %v427 = vlaneseq
        %v428 = vshrl.u32 %v427, 7
        %v429 = vsub.s32 1, %v428
        %v430 = vrot.slane %v422, %v429
        %vm431 = vcmp.ne.s32.totalorder %v426, 0
        %vm432 = vcmp.ne.s32.totalorder %v430, 0
        %vm433 = vmand %vm412, %vm431
        %vm434 = vmand %vm413, %vm432
        %v435 = vsel %vm433, %v421, 0.0
        %v436 = vsel %vm434, %v420, 0.0
        %s437 = sld [smem:[#allocation7]]
        %v438 = vstv %s437
        %v439 = vmul.f32 %v438, %v435
        %v440 = vmul.f32 %v438, %v436
        %v441 = vadd.f32 %v411, %v439
        %v442 = vadd.f32 %v411, %v440
        %443 = vrot.lane.b32.xlu0 %v404, 32
        %v444 = vpop.permute.xlu0 %443
        %445 = vrot.lane.b32.xlu0 %v405, 32
        %v446 = vpop.permute.xlu0 %445
        %vm447 = vcmp.lt.s32.totalorder %v407, 32
        %v448 = vsel %vm447, %v444, %v446
        %v449 = vsel %vm447, %v446, %v444
        %v450 = vsel %vm412, %v449, 0.0
        %v451 = vsel %vm413, %v448, 0.0
        %s452 = sld [smem:[#allocation7 + $0x1]]
        %v453 = vstv %s452
        %v454 = vmul.f32 %v453, %v450
        %v455 = vmul.f32 %v453, %v451
        %v456 = vadd.f32 %v441, %v454
        %v457 = vadd.f32 %v442, %v455
        %vm458 = vcmp.lt.s32.totalorder %v409, 14
        %459 = vrot.lane.b32.xlu0 %v404, 30
        %v460 = vpop.permute.xlu0 %459
        %461 = vrot.lane.b32.xlu0 %v405, 30
        %v462 = vpop.permute.xlu0 %461
        %vm463 = vcmp.lt.s32.totalorder %v407, 30
        %v464 = vsel %vm463, %v460, %v462
        %v465 = vsel %vm463, %v462, %v460
        %v466 = vsel %vm458, 1, 0
        %v467 = vlaneseq
        %v468 = vshrl.u32 %v467, 7
        %v469 = vsub.s32 0, %v468
        %v470 = vrot.slane %v466, %v469
        %v471 = vlaneseq
        %v472 = vshrl.u32 %v471, 7
        %v473 = vsub.s32 1, %v472
        %v474 = vrot.slane %v466, %v473
        %vm475 = vcmp.ne.s32.totalorder %v470, 0
        %vm476 = vcmp.ne.s32.totalorder %v474, 0
        %vm477 = vmand %vm412, %vm475
        %vm478 = vmand %vm413, %vm476
        %v479 = vsel %vm477, %v465, 0.0
        %v480 = vsel %vm478, %v464, 0.0
        %s481 = sld [smem:[#allocation7 + $0x2]]
        %v482 = vstv %s481
        %v483 = vmul.f32 %v482, %v479
        %v484 = vmul.f32 %v482, %v480
        %v485 = vadd.f32 %v456, %v483
        %v486 = vadd.f32 %v457, %v484
        %487 = vrot.lane.b32.xlu0 %v404, 2
        %v488 = vpop.permute.xlu0 %487
        %489 = vrot.lane.b32.xlu0 %v405, 2
        %v490 = vpop.permute.xlu0 %489
        %vm491 = vcmp.lt.s32.totalorder %v407, 2
        %v492 = vsel %vm491, %v488, %v490
        %v493 = vsel %vm491, %v490, %v488
        %v496 = vcombine.low %v493, %v492
        %v498 = vunpack.c.l.s4 1966171168
        %v499 = vunpack.c.0.s8 %v498
        %v500 = vlaneseq
        %v501 = vshrl.u32 %v500, 7
        %v502 = vsub.s32 %v499, %v501
        %v503 = vrot.slane %v496, %v502
        %v505 = vunpack.c.l.s4 1966171168
        %v506 = vunpack.c.0.s8 %v505
        %v507 = vlaneseq
        %v508 = vshrl.u32 %v507, 7
        %v509 = vsub.s32 %v506, %v508
        %v510 = vrot.slane %v503, %v509
        %v512 = vsel %vm414, %v510, 0.0
        %s513 = sld [smem:[#allocation7 + $0x3]]
        %v514 = vstv %s513
        %v515 = vmul.f32 %v514, %v512
        %v517 = vlaneseq
        %v518 = vshrl.u32 %v517, 7
        %v519 = vsub.s32 0, %v518
        %v520 = vrot.slane %v515, %v519
        %v521 = vlaneseq
        %v522 = vshrl.u32 %v521, 7
        %v523 = vsub.s32 1, %v522
        %v524 = vrot.slane %v515, %v523
        %v527 = vadd.f32 %v485, %v520
        %v528 = vadd.f32 %v486, %v524
        %s529 = sld [smem:[#allocation7 + $0x4]]
        %v530 = vstv %s529
        %v531 = vmul.f32 %v530, %v404
        %v532 = vmul.f32 %v530, %v405
        %v533 = vadd.f32 %v527, %v531
        %v534 = vadd.f32 %v528, %v532
        %535 = vrot.lane.b32.xlu0 %v404, 126
        %v536 = vpop.permute.xlu0 %535
        %537 = vrot.lane.b32.xlu0 %v405, 126
        %v538 = vpop.permute.xlu0 %537
        %vm539 = vcmp.lt.s32.totalorder %v407, 126
        %v540 = vsel %vm539, %v536, %v538
        %v541 = vsel %vm539, %v538, %v536
        %v544 = vcombine.low %v540, %v541
        %v546 = vunpack.c.l.s4 1966171168
        %v547 = vunpack.c.0.s8 %v546
        %v548 = vlaneseq
        %v549 = vshrl.u32 %v548, 7
        %v550 = vsub.s32 %v547, %v549
        %v551 = vrot.slane %v544, %v550
        %v553 = vunpack.c.l.s4 1966171168
        %v554 = vunpack.c.0.s8 %v553
        %v555 = vlaneseq
        %v556 = vshrl.u32 %v555, 7
        %v557 = vsub.s32 %v554, %v556
        %v558 = vrot.slane %v551, %v557
        %v560 = vsel %vm458, %v558, 0.0
        %s561 = sld [smem:[#allocation7 + $0x5]]
        %v562 = vstv %s561
        %v563 = vmul.f32 %v562, %v560
        %v565 = vlaneseq
        %v566 = vshrl.u32 %v565, 7
        %v567 = vsub.s32 0, %v566
        %v568 = vrot.slane %v563, %v567
        %v569 = vlaneseq
        %v570 = vshrl.u32 %v569, 7
        %v571 = vsub.s32 1, %v570
        %v572 = vrot.slane %v563, %v571
        %v575 = vadd.f32 %v533, %v568
        %v576 = vadd.f32 %v534, %v572
        %vm577 = vcmp.lt.s32.totalorder %v407, 224
        %vm578 = vcmp.lt.s32.totalorder %v408, 224
        %579 = vrot.lane.b32.xlu0 %v404, 98
        %v580 = vpop.permute.xlu0 %579
        %581 = vrot.lane.b32.xlu0 %v405, 98
        %v582 = vpop.permute.xlu0 %581
        %vm583 = vcmp.lt.s32.totalorder %v407, 98
        %v584 = vsel %vm583, %v580, %v582
        %v585 = vsel %vm583, %v582, %v580
        %vm586 = vmand %vm577, %vm431
        %vm587 = vmand %vm578, %vm432
        %v588 = vsel %vm586, %v584, 0.0
        %v589 = vsel %vm587, %v585, 0.0
        %s590 = sld [smem:[#allocation7 + $0x6]]
        %v591 = vstv %s590
        %v592 = vmul.f32 %v591, %v588
        %v593 = vmul.f32 %v591, %v589
        %v594 = vadd.f32 %v575, %v592
        %v595 = vadd.f32 %v576, %v593
        %596 = vrot.lane.b32.xlu0 %v404, 96
        %v597 = vpop.permute.xlu0 %596
        %598 = vrot.lane.b32.xlu0 %v405, 96
        %v599 = vpop.permute.xlu0 %598
        %vm600 = vcmp.lt.s32.totalorder %v407, 96
        %v601 = vsel %vm600, %v597, %v599
        %v602 = vsel %vm600, %v599, %v597
        %v603 = vsel %vm577, %v601, 0.0
        %v604 = vsel %vm578, %v602, 0.0
        %s605 = sld [smem:[#allocation7 + $0x7]]
        %v606 = vstv %s605
        %v607 = vmul.f32 %v606, %v603
        %v608 = vmul.f32 %v606, %v604
        %v609 = vadd.f32 %v594, %v607
        %v610 = vadd.f32 %v595, %v608
        %611 = vrot.lane.b32.xlu0 %v404, 94
        %v612 = vpop.permute.xlu0 %611
        %613 = vrot.lane.b32.xlu0 %v405, 94
        %v614 = vpop.permute.xlu0 %613
        %vm615 = vcmp.lt.s32.totalorder %v407, 94
        %v616 = vsel %vm615, %v612, %v614
        %v617 = vsel %vm615, %v614, %v612
        %vm618 = vmand %vm577, %vm475
        %vm619 = vmand %vm578, %vm476
        %v620 = vsel %vm618, %v616, 0.0
        %v621 = vsel %vm619, %v617, 0.0
        %s622 = sld [smem:[#allocation7 + $0x8]]
        %v623 = vstv %s622
        %v624 = vmul.f32 %v623, %v620
        %v625 = vmul.f32 %v623, %v621
        %v626 = vadd.f32 %v609, %v624
        %v627 = vadd.f32 %v610, %v625
        %v628 = vxor.u32 %v626, 2147483648
        %v629 = vxor.u32 %v627, 2147483648
        %v630 = vmul.f32 %v628, 1.442695
        %v631 = vpow.pop %v630
        %v632 = vmul.f32 %v629, 1.442695
        %v633 = vpow.pop %v632
        %v634 = vadd.f32 %v631, 1.0
        %v635 = vadd.f32 %v633, 1.0
        %v636 = vrcp.pop %v634
        %v637 = vmul.f32 1.0, %v636
        %v638 = vrcp.pop %v635
        %v639 = vmul.f32 1.0, %v638
        %v640 = vlaneseq
        %v641 = vshrl.u32 %v640, 7
        %v642 = vsub.s32 0, %v641
        %v643 = vrot.slane %v637, %v642
        %v644 = vlaneseq
        %v645 = vshrl.u32 %v644, 7
        %v646 = vsub.s32 0, %v645
        %v647 = vrot.slane %v639, %v646
        %v648 = vmul.f32 %v378, %v643
        %v649 = vmul.f32 %v379, %v647
        %v650 = vmul.f32 %v380, %v643
        %v651 = vmul.f32 %v381, %v647
        %v652 = vmul.f32 %v382, %v643
        %v653 = vmul.f32 %v383, %v647
        %v654 = vmul.f32 %v384, %v643
        %v655 = vmul.f32 %v385, %v647
        %656 = vst [vmem:[%s284] sm:$0xff] %v648
        %657 = vst [vmem:[%s284 + $0x8] sm:$0xff] %v649
        %658 = vst [vmem:[%s284 + $0x10] sm:$0xff] %v650
        %659 = vst [vmem:[%s284 + $0x18] sm:$0xff] %v651
        %660 = vst [vmem:[%s284 + $0x20] sm:$0xff] %v652
        %661 = vst [vmem:[%s284 + $0x28] sm:$0xff] %v653
        %662 = vst [vmem:[%s284 + $0x30] sm:$0xff] %v654
        %663 = vst [vmem:[%s284 + $0x38] sm:$0xff] %v655
        %s664 = sand.u32 %s164, 1
        %s665 = scalar_lea.sflag [#allocation5], %s664
        %s666 = sand.u32 %s164, 1
        %s667 = smul.addr %s666, 64
        %s668 = scalar_lea.vmem [#allocation8], %s667
        // Predicated region
        $region53: #{tpu_custom_call.1} parent=43 // pred_check
          %p669 = pneg %p174
        $region54: #{tpu_custom_call.1} parent=43 // pred_check_branch
          %671 = sbr.rel (%p669) target = $region56
        $region55: #{tpu_custom_call.1} parent=43 // pred_region
          %s673 = ssub.s32 1024, 1024
          %674 = vsyncadd %s665, %s673
          %s675 = smul.addr %s25, 8
          %s676 = smul.addr %s675, 128
          %s677 = scalar_lea.hbm %s6, %s676
          %s678 = sshll.u32 %s668, 4
          %s679 = int_to_ptr.vmem [resolvable:$true] %s678
          %684 = dma.vmem_to_hbm [thread:$0]  %s679, 1024, %s677, %s665, 256, 256, 16
        $region56: #{tpu_custom_call.1} parent=43 // pred_fallthru
          _
      $region44: #{tpu_custom_call.1} parent=5 // pred_fallthru
        _
      %p685 = scmp.le.s32.totalorder 2, %s20
      // Predicated region
      $region57: #{tpu_custom_call.1} parent=5 // pred_check
        %p686 = pneg %p685
      $region58: #{tpu_custom_call.1} parent=5 // pred_check_branch
        %688 = sbr.rel (%p686) target = $region60
      $region59: #{tpu_custom_call.1} parent=5 // pred_region
        %s689 = ssub.s32 %s20, 2
        // Predicated region
        $region61: #{tpu_custom_call.1} parent=59 // pred_check
          %p690 = pneg %p180
        $region62: #{tpu_custom_call.1} parent=59 // pred_check_branch
          %692 = sbr.rel (%p690) target = $region64
        $region63: #{tpu_custom_call.1} parent=59 // pred_region
          %s693 = sand.u32 %s165, 1
          %s694 = scalar_lea.sflag [#allocation5], %s693
          %s695 = sand.u32 %s165, 1
          %s696 = smul.addr %s695, 64
          %s697 = scalar_lea.vmem [#allocation8], %s696
          %698 = dma.done %s694, 1024
        $region64: #{tpu_custom_call.1} parent=59 // pred_fallthru
          _
      $region60: #{tpu_custom_call.1} parent=5 // pred_fallthru
        _
    $region6: #{tpu_custom_call.1} parent=1 // loop_footer
      %s24 = sadd.s32 1, %s20
    $region7: #{tpu_custom_call.1} parent=1 // loop_footer_branch
      %19 = sbr.rel target = $region3
    $region8: #{tpu_custom_call.1} parent=1 // loop_exit
      _
    %699 = vsyncpa [#allocation4], 1
    %s700 = scalar_lea.sflag [#allocation4], 1
    %701 = vsyncpa %s700, 1
    %702 = vsyncpa [#allocation5], 1
    %s703 = scalar_lea.sflag [#allocation5], 1
    %704 = vsyncpa %s703, 1
    %705 = vsyncpa [#allocation6], 1
    %s706 = scalar_lea.sflag [#allocation6], 1
    %707 = vsyncpa %s706, 1

</llo_original>
